<compile_context>
chip_gen: v5e
topology: v5e:2x2
jax: 0.10.0
libtpu: 0.0.40
codegen_flags: <defaults>
</compile_context>

<pallas_src>
import functools

import jax
import jax.numpy as jnp
from jax.experimental import pallas as pl
from jax.experimental.pallas import tpu as pltpu


def _round_up(x, m):
    return (x + m - 1) // m * m


def _gelu(x, approximate):
    if approximate:
        # tanh approximation -> EUP slot (otherwise idle in this kernel).
        return jax.nn.gelu(x, approximate=True)
    # erf-based GELU, matches torch.nn.GELU() default (approximate='none').
    return 0.5 * x * (1.0 + jax.lax.erf(x * jnp.float32(0.7071067811865476)))


def _ffn_kernel(x_ref, w1_ref, b1_ref, w2_ref, b2_ref, o_ref, *scratch,
                acc_in_out, gelu_approximate):
    # Grid = (row_tiles, f_tiles); F is the reduction ("arbitrary", last) axis.
    # x_ref:  (tm, Dp)   tile of input rows
    # w1_ref: (Dp, tf)   fc1 weight slab for this F-block
    # b1_ref: (1, tf)    fc1 bias slice (fp32)
    # w2_ref: (tf, Dp)   fc2 weight slab for this F-block
    # b2_ref: (1, Dp)    fc2 bias (fp32)
    # o_ref:  (tm, Dp)   output tile (resident across the F axis)
    # acc: o_ref itself when the output is fp32, else a fp32 VMEM scratch.
    acc_ref = o_ref if acc_in_out else scratch[0]
    f = pl.program_id(1)

    @pl.when(f == 0)
    def _():
        acc_ref[...] = jnp.zeros_like(acc_ref)

    # fc1 partial for this F-block, fp32 accumulation on the MXU.
    h = jnp.dot(x_ref[...], w1_ref[...], preferred_element_type=jnp.float32)
    h = _gelu(h + b1_ref[...], gelu_approximate)
    # TODO(synk): activation dropout is identity in eval mode; training-mode
    # dropout would use pltpu.prng_seed / pltpu.prng_random_bits here.
    acc_ref[...] += jnp.dot(
        h.astype(w2_ref.dtype), w2_ref[...], preferred_element_type=jnp.float32
    )

    @pl.when(f == pl.num_programs(1) - 1)
    def _():
        if acc_in_out:
            o_ref[...] = o_ref[...] + b2_ref[...]
        else:
            o_ref[...] = (acc_ref[...] + b2_ref[...]).astype(o_ref.dtype)


def _vmem_budget_bytes():
    """Usable per-core VMEM (~85% of physical), per generation."""
    cap = 64 << 20  # conservative fallback (v7x per-TensorCore)
    try:
        info = pltpu.get_tpu_info()
        c = getattr(info, "vmem_capacity_bytes", None)
        if c:
            cap = int(c)
    except Exception:
        pass
    return int(cap * 0.85)


def _select_tiles(N, D, F, isz, osz, tm_req, tf_req, use_scratch, budget):
    """Pick 128-aligned (tm, tf) that fit the VMEM budget (double-buffered)."""
    Dp = _round_up(D, 128)
    n128 = _round_up(max(N, 1), 128) // 128
    tm = min(_round_up(tm_req, 128), n128 * 128)
    if n128 >= 2:
        # Guarantee >=2 row tiles so "parallel" rows can shard across 2 TCs (v7x).
        tm = min(tm, ((n128 + 1) // 2) * 128)
    Fp128 = _round_up(F, 128)

    def need(tm_, tf_):
        per_step = (
            tm_ * Dp * isz                    # x tile
            + Dp * tf_ * isz                  # w1 slab
            + tf_ * Dp * isz                  # w2 slab
            + _round_up(tf_, 128) * 4 + Dp * 4  # bias slices (fp32)
            + tm_ * Dp * osz                  # output tile
        )
        total = 2 * per_step                  # double-buffered pipeline
        if use_scratch:
            total += tm_ * Dp * 4             # fp32 accumulator scratch
        return total

    # F tile: collapse the F loop to one step if the full slabs fit, else the
    # largest 128-multiple that fits.
    tf = Fp128 if need(tm, Fp128) <= budget else min(_round_up(tf_req, 128), Fp128)
    while need(tm, tf) > budget and tf > 128:
        tf -= 128
    while need(tm, tf) > budget and tm > 128:
        tm -= 128
    return tm, tf, Dp, need(tm, tf)


def _pad2d(a, shape, dtype):
    if a.shape == tuple(shape):
        return a if a.dtype == dtype else a.astype(dtype)
    out = jnp.zeros(shape, dtype)
    return out.at[: a.shape[0], : a.shape[1]].set(a.astype(dtype))


def _pad_row(b, n, dtype):
    b = b.astype(dtype)
    if b.shape[0] == n:
        return b.reshape(1, n)
    return jnp.zeros((1, n), dtype).at[0, : b.shape[0]].set(b)


@functools.partial(
    jax.jit, static_argnames=("tm", "tf", "compute_dtype", "gelu_approximate")
)
def feed_forward_network(x, w1, b1, w2, b2, *, tm=512, tf=1024,
                         compute_dtype=jnp.bfloat16, gelu_approximate=False):
    """x: (..., D) -> (..., D), fused fc1 + GELU + fc2 on TPU via Pallas."""
    orig_shape = x.shape
    out_dtype = x.dtype
    D = orig_shape[-1]
    F = w1.shape[1]
    x2d = x.reshape(-1, D)
    N = x2d.shape[0]

    cd = jnp.dtype(compute_dtype) if compute_dtype is not None else jnp.dtype(x.dtype)
    isz = cd.itemsize
    osz = jnp.dtype(out_dtype).itemsize

    # Accumulate directly into o_ref when the output is fp32 (saves the scratch).
    acc_in_out = jnp.dtype(out_dtype) == jnp.float32
    use_scratch = not acc_in_out

    budget = _vmem_budget_bytes()
    tm_eff, tf_eff, Dp, vmem_need = _select_tiles(
        N, D, F, isz, osz, tm, tf, use_scratch, budget
    )
    Np = _round_up(N, tm_eff)
    Fp = _round_up(F, tf_eff)

    # Lane-dense padding (skipped when already aligned); zero padding is exact
    # since gelu(0)=0 and padded rows/cols are sliced off.
    x_p = _pad2d(x2d, (Np, Dp), cd)
    w1_p = _pad2d(w1, (Dp, Fp), cd)
    w2_p = _pad2d(w2, (Fp, Dp), cd)
    b1_p = _pad_row(b1, Fp, jnp.float32)
    b2_p = _pad_row(b2, Dp, jnp.float32)

    grid = (Np // tm_eff, Fp // tf_eff)
    row_tiles, f_tiles = grid

    vmem_limit = int(min(max(int(vmem_need * 1.25) + (2 << 20), 32 << 20), budget))

    cost = pl.CostEstimate(
        flops=int(2 * 2 * Np * Dp * Fp),           # two matmuls
        transcendentals=int(Np * Fp),              # gelu per hidden element
        bytes_accessed=int(
            Np * Dp * isz                          # x read once
            + row_tiles * 2 * Dp * Fp * isz        # W1/W2 re-streamed per row tile
            + row_tiles * f_tiles * (tf_eff + Dp) * 4  # bias slices per step
            + Np * Dp * osz                        # output
        ),
    )

    kernel = functools.partial(
        _ffn_kernel, acc_in_out=acc_in_out, gelu_approximate=gelu_approximate
    )
    scratch_shapes = [] if acc_in_out else [pltpu.VMEM((tm_eff, Dp), jnp.float32)]

    out_p = pl.pallas_call(
        kernel,
        out_shape=jax.ShapeDtypeStruct((Np, Dp), out_dtype),
        grid_spec=pltpu.PrefetchScalarGridSpec(
            num_scalar_prefetch=0,
            grid=grid,
            in_specs=[
                pl.BlockSpec((tm_eff, Dp), lambda i, f: (i, 0)),   # x rows
                pl.BlockSpec((Dp, tf_eff), lambda i, f: (0, f)),   # fc1 weight slab
                pl.BlockSpec((1, tf_eff), lambda i, f: (0, f)),    # fc1 bias slice
                pl.BlockSpec((tf_eff, Dp), lambda i, f: (f, 0)),   # fc2 weight slab
                pl.BlockSpec((1, Dp), lambda i, f: (0, 0)),        # fc2 bias
            ],
            out_specs=pl.BlockSpec((tm_eff, Dp), lambda i, f: (i, 0)),
            scratch_shapes=scratch_shapes,
        ),
        compiler_params=pltpu.CompilerParams(
            dimension_semantics=("parallel", "arbitrary"),
            vmem_limit_bytes=vmem_limit,
        ),
        cost_estimate=cost,
    )(x_p, w1_p, b1_p, w2_p, b2_p)

    if Np == N and Dp == D:
        return out_p.reshape(orig_shape)
    return out_p[:N, :D].reshape(orig_shape)


def init_params(key, embedding_dim, ffn_embedding_dim, dtype=jnp.float32):
    """Deterministic synthetic init (uniform, roughly like PyTorch Linear)."""
    k1, k2, k3, k4 = jax.random.split(key, 4)
    lim1 = 1.0 / (embedding_dim ** 0.5)
    lim2 = 1.0 / (ffn_embedding_dim ** 0.5)
    # stored as (in, out) so the kernel does x @ W
    w1 = jax.random.uniform(k1, (embedding_dim, ffn_embedding_dim), dtype, -lim1, lim1)
    b1 = jax.random.uniform(k2, (ffn_embedding_dim,), dtype, -lim1, lim1)
    w2 = jax.random.uniform(k3, (ffn_embedding_dim, embedding_dim), dtype, -lim2, lim2)
    b2 = jax.random.uniform(k4, (embedding_dim,), dtype, -lim2, lim2)
    return w1, b1, w2, b2


if __name__ == "__main__":
    embedding_dim = 32
    ffn_embedding_dim = 64
    batch, seq = 2, 8

    key = jax.random.PRNGKey(0)
    kx, kp = jax.random.split(key)
    x = jax.random.normal(kx, (batch, seq, embedding_dim), jnp.float32)
    w1, b1, w2, b2 = init_params(kp, embedding_dim, ffn_embedding_dim)

    # reference in plain JAX (dropout is identity in eval mode)
    ref = _gelu(x.reshape(-1, embedding_dim) @ w1 + b1, False) @ w2 + b2
    ref = ref.reshape(x.shape)

    # default path: bf16 matmul inputs, fp32 accumulation, fp32 output.
    out = feed_forward_network(x, w1, b1, w2, b2)
    out = jax.block_until_ready(out)
    assert out.shape == x.shape
    assert jnp.allclose(out, ref, atol=5e-2, rtol=5e-2)

    # f32 compute opt-in: must match the PyTorch-equivalent reference tightly.
    out_f32 = feed_forward_network(x, w1, b1, w2, b2, compute_dtype=jnp.float32)
    out_f32 = jax.block_until_ready(out_f32)
    assert jnp.allclose(out_f32, ref, atol=1e-5, rtol=1e-5)

    # bf16 in/out path (exercises the fp32 accumulator scratch variant).
    out_bf16 = feed_forward_network(
        x.astype(jnp.bfloat16), w1, b1, w2, b2
    )
    out_bf16 = jax.block_until_ready(out_bf16)
    assert out_bf16.dtype == jnp.bfloat16
    assert jnp.allclose(out_bf16.astype(jnp.float32), ref, atol=1e-1, rtol=1e-1)

    print("KERNEL_OK")
</pallas_src>

<mosaic_0001>
module attributes {stable_mosaic.version = 11 : i64} {
  func.func @_ffn_kernel(%arg0: i32, %arg1: i32, %arg2: memref<128x128xbf16, #tpu.memory_space<vmem>>, %arg3: memref<128x128xbf16, #tpu.memory_space<vmem>>, %arg4: memref<1x128xf32, #tpu.memory_space<vmem>>, %arg5: memref<128x128xbf16, #tpu.memory_space<vmem>>, %arg6: memref<1x128xf32, #tpu.memory_space<vmem>>, %arg7: memref<128x128xf32, #tpu.memory_space<vmem>>) attributes {dimension_semantics = [#tpu.dimension_semantics<parallel>, #tpu.dimension_semantics<arbitrary>], iteration_bounds = array<i64: 1, 1>, scalar_prefetch = 0 : i64, scratch_operands = 0 : i64, tpu.core_type = #tpu.core_type<tc>, window_params = [{transform_indices = @transform_0, window_bounds = array<i64: 128, 128>}, {transform_indices = @transform_1, window_bounds = array<i64: 128, 128>}, {transform_indices = @transform_2, window_bounds = array<i64: 1, 128>}, {transform_indices = @transform_3, window_bounds = array<i64: 128, 128>}, {pipeline_mode = #tpu.pipeline_mode<synchronous>, transform_indices = @transform_4, window_bounds = array<i64: 1, 128>}, {transform_indices = @transform_5, window_bounds = array<i64: 128, 128>}]} {
    %c0_i32 = arith.constant 0 : i32
    %0 = arith.cmpi eq, %arg1, %c0_i32 : i32
    %1 = arith.extui %0 : i1 to i32
    %c0_i32_0 = arith.constant 0 : i32
    %2 = arith.cmpi ne, %1, %c0_i32_0 : i32
    scf.if %2 {
      %cst_18 = arith.constant 0.000000e+00 : f32
      %26 = vector.broadcast %cst_18 : f32 to vector<128x128xf32>
      %c0_19 = arith.constant 0 : index
      %c0_20 = arith.constant 0 : index
      %27 = vector.load %arg7[%c0_19, %c0_20] : memref<128x128xf32, #tpu.memory_space<vmem>>, vector<128x128xf32>
      tpu.vector_store %arg7[%c0_19, %c0_20], %26 {strides = array<i32>} : memref<128x128xf32, #tpu.memory_space<vmem>>, vector<128x128xf32>,
    } else {
    }
    %c0 = arith.constant 0 : index
    %c0_1 = arith.constant 0 : index
    %3 = vector.load %arg2[%c0, %c0_1] : memref<128x128xbf16, #tpu.memory_space<vmem>>, vector<128x128xbf16>
    %c0_2 = arith.constant 0 : index
    %c0_3 = arith.constant 0 : index
    %4 = vector.load %arg3[%c0_2, %c0_3] : memref<128x128xbf16, #tpu.memory_space<vmem>>, vector<128x128xbf16>
    %cst = arith.constant dense<0.000000e+00> : vector<128x128xf32>
    %5 = tpu.matmul %3, %4, %cst {dimension_numbers = #tpu.dot_dimension_numbers<[1], [0], [0], [1], [0, 0, 1, 1], [], []>} : vector<128x128xbf16>, vector<128x128xbf16>, vector<128x128xf32> -> vector<128x128xf32>
    %c0_4 = arith.constant 0 : index
    %c0_5 = arith.constant 0 : index
    %6 = vector.load %arg4[%c0_4, %c0_5] : memref<1x128xf32, #tpu.memory_space<vmem>>, vector<1x128xf32>
    %7 = vector.broadcast %6 : vector<1x128xf32> to vector<128x128xf32>
    %8 = arith.addf %5, %7 : vector<128x128xf32>
    %cst_6 = arith.constant 5.000000e-01 : f32
    %9 = vector.broadcast %cst_6 : f32 to vector<128x128xf32>
    %10 = arith.mulf %9, %8 : vector<128x128xf32>
    %cst_7 = arith.constant 0.707106769 : f32
    %11 = vector.broadcast %cst_7 : f32 to vector<128x128xf32>
    %12 = arith.mulf %8, %11 : vector<128x128xf32>
    %13 = math.erf %12 : vector<128x128xf32>
    %cst_8 = arith.constant 1.000000e+00 : f32
    %14 = vector.broadcast %cst_8 : f32 to vector<128x128xf32>
    %15 = arith.addf %14, %13 : vector<128x128xf32>
    %16 = arith.mulf %10, %15 : vector<128x128xf32>
    %c0_9 = arith.constant 0 : index
    %c0_10 = arith.constant 0 : index
    %17 = vector.load %arg7[%c0_9, %c0_10] : memref<128x128xf32, #tpu.memory_space<vmem>>, vector<128x128xf32>
    %18 = arith.truncf %16 : vector<128x128xf32> to vector<128x128xbf16>
    %c0_11 = arith.constant 0 : index
    %c0_12 = arith.constant 0 : index
    %19 = vector.load %arg5[%c0_11, %c0_12] : memref<128x128xbf16, #tpu.memory_space<vmem>>, vector<128x128xbf16>
    %cst_13 = arith.constant dense<0.000000e+00> : vector<128x128xf32>
    %20 = tpu.matmul %18, %19, %cst_13 {dimension_numbers = #tpu.dot_dimension_numbers<[1], [0], [0], [1], [0, 0, 1, 1], [], []>} : vector<128x128xbf16>, vector<128x128xbf16>, vector<128x128xf32> -> vector<128x128xf32>
    %21 = arith.addf %17, %20 : vector<128x128xf32>
    %c0_14 = arith.constant 0 : index
    %c0_15 = arith.constant 0 : index
    %22 = vector.load %arg7[%c0_14, %c0_15] : memref<128x128xf32, #tpu.memory_space<vmem>>, vector<128x128xf32>
    tpu.vector_store %arg7[%c0_14, %c0_15], %21 {strides = array<i32>} : memref<128x128xf32, #tpu.memory_space<vmem>>, vector<128x128xf32>,
    %c0_i32_16 = arith.constant 0 : i32
    %23 = arith.cmpi eq, %arg1, %c0_i32_16 : i32
    %24 = arith.extui %23 : i1 to i32
    %c0_i32_17 = arith.constant 0 : i32
    %25 = arith.cmpi ne, %24, %c0_i32_17 : i32
    scf.if %25 {
      %c0_18 = arith.constant 0 : index
      %c0_19 = arith.constant 0 : index
      %26 = vector.load %arg7[%c0_18, %c0_19] : memref<128x128xf32, #tpu.memory_space<vmem>>, vector<128x128xf32>
      %c0_20 = arith.constant 0 : index
      %c0_21 = arith.constant 0 : index
      %27 = vector.load %arg6[%c0_20, %c0_21] : memref<1x128xf32, #tpu.memory_space<vmem>>, vector<1x128xf32>
      %28 = vector.broadcast %27 : vector<1x128xf32> to vector<128x128xf32>
      %29 = arith.addf %26, %28 : vector<128x128xf32>
      %c0_22 = arith.constant 0 : index
      %c0_23 = arith.constant 0 : index
      %30 = vector.load %arg7[%c0_22, %c0_23] : memref<128x128xf32, #tpu.memory_space<vmem>>, vector<128x128xf32>
      tpu.vector_store %arg7[%c0_22, %c0_23], %29 {strides = array<i32>} : memref<128x128xf32, #tpu.memory_space<vmem>>, vector<128x128xf32>,
    } else {
    }
    return
  }
  func.func @transform_0(%arg0: i32, %arg1: i32) -> (i32, i32) {
    %c0_i32 = arith.constant 0 : i32
    %c0_i32_0 = arith.constant 0 : i32
    return %arg0, %c0_i32 : i32, i32
  }
  func.func @transform_1(%arg0: i32, %arg1: i32) -> (i32, i32) {
    %c0_i32 = arith.constant 0 : i32
    %c0_i32_0 = arith.constant 0 : i32
    return %c0_i32, %arg1 : i32, i32
  }
  func.func @transform_2(%arg0: i32, %arg1: i32) -> (i32, i32) {
    %c0_i32 = arith.constant 0 : i32
    %c0_i32_0 = arith.constant 0 : i32
    return %c0_i32, %arg1 : i32, i32
  }
  func.func @transform_3(%arg0: i32, %arg1: i32) -> (i32, i32) {
    %c0_i32 = arith.constant 0 : i32
    %c0_i32_0 = arith.constant 0 : i32
    return %arg1, %c0_i32 : i32, i32
  }
  func.func @transform_4(%arg0: i32, %arg1: i32) -> (i32, i32) {
    %c0_i32 = arith.constant 0 : i32
    %c0_i32_0 = arith.constant 0 : i32
    %c0_i32_1 = arith.constant 0 : i32
    return %c0_i32, %c0_i32_0 : i32, i32
  }
  func.func @transform_5(%arg0: i32, %arg1: i32) -> (i32, i32) {
    %c0_i32 = arith.constant 0 : i32
    %c0_i32_0 = arith.constant 0 : i32
    return %arg0, %c0_i32 : i32, i32
  }
}

</mosaic_0001>

<llo_original>
// kernel: feed_forward_network.1
$region0: #{feed_forward_network.1}
  #allocation0 [shape = 'u32[]', space=smem, size = 0x4, offset = 0x4, fixed_abs, tag = 'smem constant byte address 0x4 - core index']
  #allocation1 [shape = 'u32[72,128]{1,0:T(1,128)}', space=vmem, size = 0x9000, scoped, tag = 'internal scratch']
  %s0 = inlined_call_operand.vmem [shape: bf16[128,128], index: 0, kind: input, shape index: {}]
  %s1 = inlined_call_operand.vmem [shape: bf16[128,128], index: 1, kind: input, shape index: {}]
  %s2 = inlined_call_operand.vmem [shape: f32[1,128], index: 2, kind: input, shape index: {}]
  %s3 = inlined_call_operand.vmem [shape: bf16[128,128], index: 3, kind: input, shape index: {}]
  %s4 = inlined_call_operand.vmem [shape: f32[1,128], index: 4, kind: input, shape index: {}]
  %s5 = inlined_call_operand.vmem [shape: f32[128,128], index: 5, kind: output, shape index: {}]
  %s6 = sld [smem:[#allocation0]]
  $region38: #{feed_forward_network.1} parent=0
    _
  %s8 = ssub.s32 1, %s6
  %s9 = scalar_select 0, %s8, %s6
  // Predicated region
  $region2: #{feed_forward_network.1} parent=0 // pred_check
    _
  $region3: #{feed_forward_network.1} parent=0 // pred_check_branch
    %11 = sbr.rel (0) target = $region5
  $region4: #{feed_forward_network.1} parent=0 // pred_region
    _
  $region5: #{feed_forward_network.1} parent=0 // pred_fallthru
    _
  // Predicated region
  $region6: #{feed_forward_network.1} parent=0 // pred_check
    _
  $region7: #{feed_forward_network.1} parent=0 // pred_check_branch
    %13 = sbr.rel (0) target = $region9
  $region8: #{feed_forward_network.1} parent=0 // pred_region
    _
  $region9: #{feed_forward_network.1} parent=0 // pred_fallthru
    _
  // Predicated region
  $region10: #{feed_forward_network.1} parent=0 // pred_check
    _
  $region11: #{feed_forward_network.1} parent=0 // pred_check_branch
    %15 = sbr.rel (0) target = $region13
  $region12: #{feed_forward_network.1} parent=0 // pred_region
    _
  $region13: #{feed_forward_network.1} parent=0 // pred_fallthru
    _
  // Predicated region
  $region14: #{feed_forward_network.1} parent=0 // pred_check
    _
  $region15: #{feed_forward_network.1} parent=0 // pred_check_branch
    %17 = sbr.rel (0) target = $region17
  $region16: #{feed_forward_network.1} parent=0 // pred_region
    _
  $region17: #{feed_forward_network.1} parent=0 // pred_fallthru
    _
  // Predicated region
  $region18: #{feed_forward_network.1} parent=0 // pred_check
    _
  $region19: #{feed_forward_network.1} parent=0 // pred_check_branch
    %19 = sbr.rel (0) target = $region21
  $region20: #{feed_forward_network.1} parent=0 // pred_region
    _
  $region21: #{feed_forward_network.1} parent=0 // pred_fallthru
    _
  %p20 = scmp.eq.s32.totalorder 0, 0
  // Predicated region
  $region22: #{feed_forward_network.1} parent=0 // pred_check
    %p21 = pneg %p20
  $region23: #{feed_forward_network.1} parent=0 // pred_check_branch
    %23 = sbr.rel (%p21) target = $region25
  $region24: #{feed_forward_network.1} parent=0 // pred_region
    %24 = vst [vmem:[%s5] sm:$0xff] 0.0
    %25 = vst [vmem:[%s5 + $0x8] sm:$0xff] 0.0
    %26 = vst [vmem:[%s5 + $0x10] sm:$0xff] 0.0
    %27 = vst [vmem:[%s5 + $0x18] sm:$0xff] 0.0
    %28 = vst [vmem:[%s5 + $0x20] sm:$0xff] 0.0
    %29 = vst [vmem:[%s5 + $0x28] sm:$0xff] 0.0
    %30 = vst [vmem:[%s5 + $0x30] sm:$0xff] 0.0
    %31 = vst [vmem:[%s5 + $0x38] sm:$0xff] 0.0
    %32 = vst [vmem:[%s5 + $0x40] sm:$0xff] 0.0
    %33 = vst [vmem:[%s5 + $0x48] sm:$0xff] 0.0
    %34 = vst [vmem:[%s5 + $0x50] sm:$0xff] 0.0
    %35 = vst [vmem:[%s5 + $0x58] sm:$0xff] 0.0
    %36 = vst [vmem:[%s5 + $0x60] sm:$0xff] 0.0
    %37 = vst [vmem:[%s5 + $0x68] sm:$0xff] 0.0
    %38 = vst [vmem:[%s5 + $0x70] sm:$0xff] 0.0
    %39 = vst [vmem:[%s5 + $0x78] sm:$0xff] 0.0
  $region25: #{feed_forward_network.1} parent=0 // pred_fallthru
    _
  %v40 = vld [vmem:[%s0] sm:$0xf]
  %v41 = vld [vmem:[%s0 + $0x4] sm:$0xf]
  %v42 = vld [vmem:[%s0 + $0x8] sm:$0xf]
  %v43 = vld [vmem:[%s0 + $0xc] sm:$0xf]
  %v44 = vld [vmem:[%s0 + $0x10] sm:$0xf]
  %v45 = vld [vmem:[%s0 + $0x14] sm:$0xf]
  %v46 = vld [vmem:[%s0 + $0x18] sm:$0xf]
  %v47 = vld [vmem:[%s0 + $0x1c] sm:$0xf]
  %v48 = vld [vmem:[%s0 + $0x20] sm:$0xf]
  %v49 = vld [vmem:[%s0 + $0x24] sm:$0xf]
  %v50 = vld [vmem:[%s0 + $0x28] sm:$0xf]
  %v51 = vld [vmem:[%s0 + $0x2c] sm:$0xf]
  %v52 = vld [vmem:[%s0 + $0x30] sm:$0xf]
  %v53 = vld [vmem:[%s0 + $0x34] sm:$0xf]
  %v54 = vld [vmem:[%s0 + $0x38] sm:$0xf]
  %v55 = vld [vmem:[%s0 + $0x3c] sm:$0xf]
  %v56 = vld [vmem:[%s1] sm:$0xf]
  %v57 = vld [vmem:[%s1 + $0x4] sm:$0xf]
  %v58 = vld [vmem:[%s1 + $0x8] sm:$0xf]
  %v59 = vld [vmem:[%s1 + $0xc] sm:$0xf]
  %v60 = vld [vmem:[%s1 + $0x10] sm:$0xf]
  %v61 = vld [vmem:[%s1 + $0x14] sm:$0xf]
  %v62 = vld [vmem:[%s1 + $0x18] sm:$0xf]
  %v63 = vld [vmem:[%s1 + $0x1c] sm:$0xf]
  %v64 = vld [vmem:[%s1 + $0x20] sm:$0xf]
  %v65 = vld [vmem:[%s1 + $0x24] sm:$0xf]
  %v66 = vld [vmem:[%s1 + $0x28] sm:$0xf]
  %v67 = vld [vmem:[%s1 + $0x2c] sm:$0xf]
  %v68 = vld [vmem:[%s1 + $0x30] sm:$0xf]
  %v69 = vld [vmem:[%s1 + $0x34] sm:$0xf]
  %v70 = vld [vmem:[%s1 + $0x38] sm:$0xf]
  %v71 = vld [vmem:[%s1 + $0x3c] sm:$0xf]
  %v72 = vld [vmem:[%s2] sm:$0x1]
  %v74 = vperm.slane %v72, 0
  %v92 = vunpack.c.l.b16 %v40
  %v93 = vunpack.c.l.b16 %v41
  %v94 = vunpack.c.l.b16 %v42
  %v95 = vunpack.c.l.b16 %v43
  %v96 = vunpack.c.l.b16 %v44
  %v97 = vunpack.c.l.b16 %v45
  %v98 = vunpack.c.l.b16 %v46
  %v99 = vunpack.c.l.b16 %v47
  %v100 = vunpack.c.l.b16 %v48
  %v101 = vunpack.c.l.b16 %v49
  %v102 = vunpack.c.l.b16 %v50
  %v103 = vunpack.c.l.b16 %v51
  %v104 = vunpack.c.l.b16 %v52
  %v105 = vunpack.c.l.b16 %v53
  %v106 = vunpack.c.l.b16 %v54
  %v107 = vunpack.c.l.b16 %v55
  %v108 = vpack.c.b16 %v93, %v92
  %v109 = vpack.c.b16 %v95, %v94
  %v110 = vpack.c.b16 %v97, %v96
  %v111 = vpack.c.b16 %v99, %v98
  %v112 = vpack.c.b16 %v101, %v100
  %v113 = vpack.c.b16 %v103, %v102
  %v114 = vpack.c.b16 %v105, %v104
  %v115 = vpack.c.b16 %v107, %v106
  %v140 = vunpack.c.l.b16 %v56
  %v141 = vunpack.c.l.b16 %v57
  %v142 = vunpack.c.l.b16 %v58
  %v143 = vunpack.c.l.b16 %v59
  %v144 = vunpack.c.l.b16 %v60
  %v145 = vunpack.c.l.b16 %v61
  %v146 = vunpack.c.l.b16 %v62
  %v147 = vunpack.c.l.b16 %v63
  %v148 = vunpack.c.l.b16 %v64
  %v149 = vunpack.c.l.b16 %v65
  %v150 = vunpack.c.l.b16 %v66
  %v151 = vunpack.c.l.b16 %v67
  %v152 = vunpack.c.l.b16 %v68
  %v153 = vunpack.c.l.b16 %v69
  %v154 = vunpack.c.l.b16 %v70
  %v155 = vunpack.c.l.b16 %v71
  %v156 = vpack.c.b16 %v141, %v140
  %v157 = vpack.c.b16 %v143, %v142
  %v158 = vpack.c.b16 %v145, %v144
  %v159 = vpack.c.b16 %v147, %v146
  %v160 = vpack.c.b16 %v149, %v148
  %v161 = vpack.c.b16 %v151, %v150
  %v162 = vpack.c.b16 %v153, %v152
  %v163 = vpack.c.b16 %v155, %v154
  %172 = vmatpush.bf16.msra.mxu0 %v163
  %173 = vmatpush.bf16.msra.mxu0 %v162
  %174 = vmatpush.bf16.msra.mxu0 %v161
  %175 = vmatpush.bf16.msra.mxu0 %v160
  %176 = vmatpush.bf16.msra.mxu0 %v159
  %177 = vmatpush.bf16.msra.mxu0 %v158
  %178 = vmatpush.bf16.msra.mxu0 %v157
  %179 = vmatpush.bf16.msra.mxu0 %v156
  %180 = vmatmul.bf16.gmra.mxu0 %v108
  %v181 = vpop.f32.mrf.mxu0
  %v182 = vadd.f32 %v74, %v181
  %v183 = vpop.f32.mrf.mxu0
  %v184 = vadd.f32 %v74, %v183
  %185 = vmatmul.bf16.gmra.mxu0 %v109
  %v186 = vpop.f32.mrf.mxu0
  %v187 = vadd.f32 %v74, %v186
  %v188 = vpop.f32.mrf.mxu0
  %v189 = vadd.f32 %v74, %v188
  %190 = vmatmul.bf16.gmra.mxu0 %v110
  %v191 = vpop.f32.mrf.mxu0
  %v192 = vadd.f32 %v74, %v191
  %v193 = vpop.f32.mrf.mxu0
  %v194 = vadd.f32 %v74, %v193
  %195 = vmatmul.bf16.gmra.mxu0 %v111
  %v196 = vpop.f32.mrf.mxu0
  %v197 = vadd.f32 %v74, %v196
  %v198 = vpop.f32.mrf.mxu0
  %v199 = vadd.f32 %v74, %v198
  %200 = vmatmul.bf16.gmra.mxu0 %v112
  %v201 = vpop.f32.mrf.mxu0
  %v202 = vadd.f32 %v74, %v201
  %v203 = vpop.f32.mrf.mxu0
  %v204 = vadd.f32 %v74, %v203
  %205 = vmatmul.bf16.gmra.mxu0 %v113
  %v206 = vpop.f32.mrf.mxu0
  %v207 = vadd.f32 %v74, %v206
  %v208 = vpop.f32.mrf.mxu0
  %v209 = vadd.f32 %v74, %v208
  %210 = vmatmul.bf16.gmra.mxu0 %v114
  %v211 = vpop.f32.mrf.mxu0
  %v212 = vadd.f32 %v74, %v211
  %v213 = vpop.f32.mrf.mxu0
  %v214 = vadd.f32 %v74, %v213
  %215 = vmatmul.bf16.gmra.mxu0 %v115
  %v216 = vpop.f32.mrf.mxu0
  %v217 = vadd.f32 %v74, %v216
  %v218 = vpop.f32.mrf.mxu0
  %v219 = vadd.f32 %v74, %v218
  %220 = vdwg.mxu0
  %v221 = vmul.f32 %v182, 0.5
  %v222 = vmul.f32 %v184, 0.5
  %v223 = vmul.f32 %v187, 0.5
  %v224 = vmul.f32 %v189, 0.5
  %v225 = vmul.f32 %v192, 0.5
  %v226 = vmul.f32 %v194, 0.5
  %v227 = vmul.f32 %v197, 0.5
  %v228 = vmul.f32 %v199, 0.5
  %v229 = vmul.f32 %v202, 0.5
  %v230 = vmul.f32 %v204, 0.5
  %v231 = vmul.f32 %v207, 0.5
  %v232 = vmul.f32 %v209, 0.5
  %v233 = vmul.f32 %v212, 0.5
  %v234 = vmul.f32 %v214, 0.5
  %v235 = vmul.f32 %v217, 0.5
  %v236 = vmul.f32 %v219, 0.5
  %v237 = vmul.f32 %v182, 0.70710677
  %v238 = vmul.f32 %v184, 0.70710677
  %v239 = vmul.f32 %v187, 0.70710677
  %v240 = vmul.f32 %v189, 0.70710677
  %v241 = vmul.f32 %v192, 0.70710677
  %v242 = vmul.f32 %v194, 0.70710677
  %v243 = vmul.f32 %v197, 0.70710677
  %v244 = vmul.f32 %v199, 0.70710677
  %v245 = vmul.f32 %v202, 0.70710677
  %v246 = vmul.f32 %v204, 0.70710677
  %v247 = vmul.f32 %v207, 0.70710677
  %v248 = vmul.f32 %v209, 0.70710677
  %v249 = vmul.f32 %v212, 0.70710677
  %v250 = vmul.f32 %v214, 0.70710677
  %v251 = vmul.f32 %v217, 0.70710677
  %v252 = vmul.f32 %v219, 0.70710677
  %v253 = vmul.f32 %v237, %v237
  %v254 = vmin.f32 16.0, %v253
  %v255 = vmul.f32 %v254, 2.1237322e-06
  %v256 = vadd.f32 %v255, 0.00028619796
  %v257 = vmul.f32 %v254, %v256
  %v258 = vadd.f32 %v257, 0.0036580483
  %v259 = vmul.f32 %v254, %v258
  %v260 = vadd.f32 %v259, 0.05243302
  %v261 = vmul.f32 %v254, %v260
  %v262 = vadd.f32 %v261, 0.18741608
  %v263 = vmul.f32 %v254, %v262
  %v264 = vadd.f32 %v263, 1.1283791
  %v265 = vmul.f32 %v237, %v264
  %v266 = vmul.f32 %v254, 3.8918573e-05
  %v267 = vadd.f32 %v266, 0.001143296
  %v268 = vmul.f32 %v254, %v267
  %v269 = vadd.f32 %v268, 0.014752088
  %v270 = vmul.f32 %v254, %v269
  %v271 = vadd.f32 %v270, 0.112945676
  %v272 = vmul.f32 %v254, %v271
  %v273 = vadd.f32 %v272, 0.4994258
  %v274 = vmul.f32 %v254, %v273
  %v275 = vadd.f32 %v274, 1.0
  %v276 = vrcp.pop %v275
  %v277 = vmul.f32 %v275, %v276
  %v278 = vsub.f32 1.0, %v277
  %v279 = vmul.f32 %v276, %v278
  %v280 = vadd.f32 %v276, %v279
  %vm281 = vweird.f32 %v275
  %vm282 = vweird.f32 %v276
  %vm283 = vmor %vm281, %vm282
  %v284 = vsel %vm283, %v276, %v280
  %v285 = vand.u32 2147483647, %v275
  %vm286 = vcmp.eq.f32.partialorder %v285, 8.507059e+37
  %v287 = vand.u32 %v275, 2147483648
  %v288 = vor.u32 1.1754944e-38, %v287
  %v289 = vsel %vm286, %v288, %v284
  %v290 = vmul.f32 %v265, %v289
  %v291 = vmin.f32 %v290, 1.0
  %v292 = vmax.f32 %v291, -1.0
  %v293 = vmul.f32 %v238, %v238
  %v294 = vmin.f32 16.0, %v293
  %v295 = vmul.f32 %v294, 2.1237322e-06
  %v296 = vadd.f32 %v295, 0.00028619796
  %v297 = vmul.f32 %v294, %v296
  %v298 = vadd.f32 %v297, 0.0036580483
  %v299 = vmul.f32 %v294, %v298
  %v300 = vadd.f32 %v299, 0.05243302
  %v301 = vmul.f32 %v294, %v300
  %v302 = vadd.f32 %v301, 0.18741608
  %v303 = vmul.f32 %v294, %v302
  %v304 = vadd.f32 %v303, 1.1283791
  %v305 = vmul.f32 %v238, %v304
  %v306 = vmul.f32 %v294, 3.8918573e-05
  %v307 = vadd.f32 %v306, 0.001143296
  %v308 = vmul.f32 %v294, %v307
  %v309 = vadd.f32 %v308, 0.014752088
  %v310 = vmul.f32 %v294, %v309
  %v311 = vadd.f32 %v310, 0.112945676
  %v312 = vmul.f32 %v294, %v311
  %v313 = vadd.f32 %v312, 0.4994258
  %v314 = vmul.f32 %v294, %v313
  %v315 = vadd.f32 %v314, 1.0
  %v316 = vrcp.pop %v315
  %v317 = vmul.f32 %v315, %v316
  %v318 = vsub.f32 1.0, %v317
  %v319 = vmul.f32 %v316, %v318
  %v320 = vadd.f32 %v316, %v319
  %vm321 = vweird.f32 %v315
  %vm322 = vweird.f32 %v316
  %vm323 = vmor %vm321, %vm322
  %v324 = vsel %vm323, %v316, %v320
  %v325 = vand.u32 2147483647, %v315
  %vm326 = vcmp.eq.f32.partialorder %v325, 8.507059e+37
  %v327 = vand.u32 %v315, 2147483648
  %v328 = vor.u32 1.1754944e-38, %v327
  %v329 = vsel %vm326, %v328, %v324
  %v330 = vmul.f32 %v305, %v329
  %v331 = vmin.f32 %v330, 1.0
  %v332 = vmax.f32 %v331, -1.0
  %v333 = vmul.f32 %v239, %v239
  %v334 = vmin.f32 16.0, %v333
  %v335 = vmul.f32 %v334, 2.1237322e-06
  %v336 = vadd.f32 %v335, 0.00028619796
  %v337 = vmul.f32 %v334, %v336
  %v338 = vadd.f32 %v337, 0.0036580483
  %v339 = vmul.f32 %v334, %v338
  %v340 = vadd.f32 %v339, 0.05243302
  %v341 = vmul.f32 %v334, %v340
  %v342 = vadd.f32 %v341, 0.18741608
  %v343 = vmul.f32 %v334, %v342
  %v344 = vadd.f32 %v343, 1.1283791
  %v345 = vmul.f32 %v239, %v344
  %v346 = vmul.f32 %v334, 3.8918573e-05
  %v347 = vadd.f32 %v346, 0.001143296
  %v348 = vmul.f32 %v334, %v347
  %v349 = vadd.f32 %v348, 0.014752088
  %v350 = vmul.f32 %v334, %v349
  %v351 = vadd.f32 %v350, 0.112945676
  %v352 = vmul.f32 %v334, %v351
  %v353 = vadd.f32 %v352, 0.4994258
  %v354 = vmul.f32 %v334, %v353
  %v355 = vadd.f32 %v354, 1.0
  %v356 = vrcp.pop %v355
  %v357 = vmul.f32 %v355, %v356
  %v358 = vsub.f32 1.0, %v357
  %v359 = vmul.f32 %v356, %v358
  %v360 = vadd.f32 %v356, %v359
  %vm361 = vweird.f32 %v355
  %vm362 = vweird.f32 %v356
  %vm363 = vmor %vm361, %vm362
  %v364 = vsel %vm363, %v356, %v360
  %v365 = vand.u32 2147483647, %v355
  %vm366 = vcmp.eq.f32.partialorder %v365, 8.507059e+37
  %v367 = vand.u32 %v355, 2147483648
  %v368 = vor.u32 1.1754944e-38, %v367
  %v369 = vsel %vm366, %v368, %v364
  %v370 = vmul.f32 %v345, %v369
  %v371 = vmin.f32 %v370, 1.0
  %v372 = vmax.f32 %v371, -1.0
  %v373 = vmul.f32 %v240, %v240
  %v374 = vmin.f32 16.0, %v373
  %v375 = vmul.f32 %v374, 2.1237322e-06
  %v376 = vadd.f32 %v375, 0.00028619796
  %v377 = vmul.f32 %v374, %v376
  %v378 = vadd.f32 %v377, 0.0036580483
  %v379 = vmul.f32 %v374, %v378
  %v380 = vadd.f32 %v379, 0.05243302
  %v381 = vmul.f32 %v374, %v380
  %v382 = vadd.f32 %v381, 0.18741608
  %v383 = vmul.f32 %v374, %v382
  %v384 = vadd.f32 %v383, 1.1283791
  %v385 = vmul.f32 %v240, %v384
  %v386 = vmul.f32 %v374, 3.8918573e-05
  %v387 = vadd.f32 %v386, 0.001143296
  %v388 = vmul.f32 %v374, %v387
  %v389 = vadd.f32 %v388, 0.014752088
  %v390 = vmul.f32 %v374, %v389
  %v391 = vadd.f32 %v390, 0.112945676
  %v392 = vmul.f32 %v374, %v391
  %v393 = vadd.f32 %v392, 0.4994258
  %v394 = vmul.f32 %v374, %v393
  %v395 = vadd.f32 %v394, 1.0
  %v396 = vrcp.pop %v395
  %v397 = vmul.f32 %v395, %v396
  %v398 = vsub.f32 1.0, %v397
  %v399 = vmul.f32 %v396, %v398
  %v400 = vadd.f32 %v396, %v399
  %vm401 = vweird.f32 %v395
  %vm402 = vweird.f32 %v396
  %vm403 = vmor %vm401, %vm402
  %v404 = vsel %vm403, %v396, %v400
  %v405 = vand.u32 2147483647, %v395
  %vm406 = vcmp.eq.f32.partialorder %v405, 8.507059e+37
  %v407 = vand.u32 %v395, 2147483648
  %v408 = vor.u32 1.1754944e-38, %v407
  %v409 = vsel %vm406, %v408, %v404
  %v410 = vmul.f32 %v385, %v409
  %v411 = vmin.f32 %v410, 1.0
  %v412 = vmax.f32 %v411, -1.0
  %v413 = vmul.f32 %v241, %v241
  %v414 = vmin.f32 16.0, %v413
  %v415 = vmul.f32 %v414, 2.1237322e-06
  %v416 = vadd.f32 %v415, 0.00028619796
  %v417 = vmul.f32 %v414, %v416
  %v418 = vadd.f32 %v417, 0.0036580483
  %v419 = vmul.f32 %v414, %v418
  %v420 = vadd.f32 %v419, 0.05243302
  %v421 = vmul.f32 %v414, %v420
  %v422 = vadd.f32 %v421, 0.18741608
  %v423 = vmul.f32 %v414, %v422
  %v424 = vadd.f32 %v423, 1.1283791
  %v425 = vmul.f32 %v241, %v424
  %v426 = vmul.f32 %v414, 3.8918573e-05
  %v427 = vadd.f32 %v426, 0.001143296
  %v428 = vmul.f32 %v414, %v427
  %v429 = vadd.f32 %v428, 0.014752088
  %v430 = vmul.f32 %v414, %v429
  %v431 = vadd.f32 %v430, 0.112945676
  %v432 = vmul.f32 %v414, %v431
  %v433 = vadd.f32 %v432, 0.4994258
  %v434 = vmul.f32 %v414, %v433
  %v435 = vadd.f32 %v434, 1.0
  %v436 = vrcp.pop %v435
  %v437 = vmul.f32 %v435, %v436
  %v438 = vsub.f32 1.0, %v437
  %v439 = vmul.f32 %v436, %v438
  %v440 = vadd.f32 %v436, %v439
  %vm441 = vweird.f32 %v435
  %vm442 = vweird.f32 %v436
  %vm443 = vmor %vm441, %vm442
  %v444 = vsel %vm443, %v436, %v440
  %v445 = vand.u32 2147483647, %v435
  %vm446 = vcmp.eq.f32.partialorder %v445, 8.507059e+37
  %v447 = vand.u32 %v435, 2147483648
  %v448 = vor.u32 1.1754944e-38, %v447
  %v449 = vsel %vm446, %v448, %v444
  %v450 = vmul.f32 %v425, %v449
  %v451 = vmin.f32 %v450, 1.0
  %v452 = vmax.f32 %v451, -1.0
  %v453 = vmul.f32 %v242, %v242
  %v454 = vmin.f32 16.0, %v453
  %v455 = vmul.f32 %v454, 2.1237322e-06
  %v456 = vadd.f32 %v455, 0.00028619796
  %v457 = vmul.f32 %v454, %v456
  %v458 = vadd.f32 %v457, 0.0036580483
  %v459 = vmul.f32 %v454, %v458
  %v460 = vadd.f32 %v459, 0.05243302
  %v461 = vmul.f32 %v454, %v460
  %v462 = vadd.f32 %v461, 0.18741608
  %v463 = vmul.f32 %v454, %v462
  %v464 = vadd.f32 %v463, 1.1283791
  %v465 = vmul.f32 %v242, %v464
  %v466 = vmul.f32 %v454, 3.8918573e-05
  %v467 = vadd.f32 %v466, 0.001143296
  %v468 = vmul.f32 %v454, %v467
  %v469 = vadd.f32 %v468, 0.014752088
  %v470 = vmul.f32 %v454, %v469
  %v471 = vadd.f32 %v470, 0.112945676
  %v472 = vmul.f32 %v454, %v471
  %v473 = vadd.f32 %v472, 0.4994258
  %v474 = vmul.f32 %v454, %v473
  %v475 = vadd.f32 %v474, 1.0
  %v476 = vrcp.pop %v475
  %v477 = vmul.f32 %v475, %v476
  %v478 = vsub.f32 1.0, %v477
  %v479 = vmul.f32 %v476, %v478
  %v480 = vadd.f32 %v476, %v479
  %vm481 = vweird.f32 %v475
  %vm482 = vweird.f32 %v476
  %vm483 = vmor %vm481, %vm482
  %v484 = vsel %vm483, %v476, %v480
  %v485 = vand.u32 2147483647, %v475
  %vm486 = vcmp.eq.f32.partialorder %v485, 8.507059e+37
  %v487 = vand.u32 %v475, 2147483648
  %v488 = vor.u32 1.1754944e-38, %v487
  %v489 = vsel %vm486, %v488, %v484
  %v490 = vmul.f32 %v465, %v489
  %v491 = vmin.f32 %v490, 1.0
  %v492 = vmax.f32 %v491, -1.0
  %v493 = vmul.f32 %v243, %v243
  %v494 = vmin.f32 16.0, %v493
  %v495 = vmul.f32 %v494, 2.1237322e-06
  %v496 = vadd.f32 %v495, 0.00028619796
  %v497 = vmul.f32 %v494, %v496
  %v498 = vadd.f32 %v497, 0.0036580483
  %v499 = vmul.f32 %v494, %v498
  %v500 = vadd.f32 %v499, 0.05243302
  %v501 = vmul.f32 %v494, %v500
  %v502 = vadd.f32 %v501, 0.18741608
  %v503 = vmul.f32 %v494, %v502
  %v504 = vadd.f32 %v503, 1.1283791
  %v505 = vmul.f32 %v243, %v504
  %v506 = vmul.f32 %v494, 3.8918573e-05
  %v507 = vadd.f32 %v506, 0.001143296
  %v508 = vmul.f32 %v494, %v507
  %v509 = vadd.f32 %v508, 0.014752088
  %v510 = vmul.f32 %v494, %v509
  %v511 = vadd.f32 %v510, 0.112945676
  %v512 = vmul.f32 %v494, %v511
  %v513 = vadd.f32 %v512, 0.4994258
  %v514 = vmul.f32 %v494, %v513
  %v515 = vadd.f32 %v514, 1.0
  %v516 = vrcp.pop %v515
  %v517 = vmul.f32 %v515, %v516
  %v518 = vsub.f32 1.0, %v517
  %v519 = vmul.f32 %v516, %v518
  %v520 = vadd.f32 %v516, %v519
  %vm521 = vweird.f32 %v515
  %vm522 = vweird.f32 %v516
  %vm523 = vmor %vm521, %vm522
  %v524 = vsel %vm523, %v516, %v520
  %v525 = vand.u32 2147483647, %v515
  %vm526 = vcmp.eq.f32.partialorder %v525, 8.507059e+37
  %v527 = vand.u32 %v515, 2147483648
  %v528 = vor.u32 1.1754944e-38, %v527
  %v529 = vsel %vm526, %v528, %v524
  %v530 = vmul.f32 %v505, %v529
  %v531 = vmin.f32 %v530, 1.0
  %v532 = vmax.f32 %v531, -1.0
  %v533 = vmul.f32 %v244, %v244
  %v534 = vmin.f32 16.0, %v533
  %v535 = vmul.f32 %v534, 2.1237322e-06
  %v536 = vadd.f32 %v535, 0.00028619796
  %v537 = vmul.f32 %v534, %v536
  %v538 = vadd.f32 %v537, 0.0036580483
  %v539 = vmul.f32 %v534, %v538
  %v540 = vadd.f32 %v539, 0.05243302
  %v541 = vmul.f32 %v534, %v540
  %v542 = vadd.f32 %v541, 0.18741608
  %v543 = vmul.f32 %v534, %v542
  %v544 = vadd.f32 %v543, 1.1283791
  %v545 = vmul.f32 %v244, %v544
  %v546 = vmul.f32 %v534, 3.8918573e-05
  %v547 = vadd.f32 %v546, 0.001143296
  %v548 = vmul.f32 %v534, %v547
  %v549 = vadd.f32 %v548, 0.014752088
  %v550 = vmul.f32 %v534, %v549
  %v551 = vadd.f32 %v550, 0.112945676
  %v552 = vmul.f32 %v534, %v551
  %v553 = vadd.f32 %v552, 0.4994258
  %v554 = vmul.f32 %v534, %v553
  %v555 = vadd.f32 %v554, 1.0
  %v556 = vrcp.pop %v555
  %v557 = vmul.f32 %v555, %v556
  %v558 = vsub.f32 1.0, %v557
  %v559 = vmul.f32 %v556, %v558
  %v560 = vadd.f32 %v556, %v559
  %vm561 = vweird.f32 %v555
  %vm562 = vweird.f32 %v556
  %vm563 = vmor %vm561, %vm562
  %v564 = vsel %vm563, %v556, %v560
  %v565 = vand.u32 2147483647, %v555
  %vm566 = vcmp.eq.f32.partialorder %v565, 8.507059e+37
  %v567 = vand.u32 %v555, 2147483648
  %v568 = vor.u32 1.1754944e-38, %v567
  %v569 = vsel %vm566, %v568, %v564
  %v570 = vmul.f32 %v545, %v569
  %v571 = vmin.f32 %v570, 1.0
  %v572 = vmax.f32 %v571, -1.0
  %v573 = vmul.f32 %v245, %v245
  %v574 = vmin.f32 16.0, %v573
  %v575 = vmul.f32 %v574, 2.1237322e-06
  %v576 = vadd.f32 %v575, 0.00028619796
  %v577 = vmul.f32 %v574, %v576
  %v578 = vadd.f32 %v577, 0.0036580483
  %v579 = vmul.f32 %v574, %v578
  %v580 = vadd.f32 %v579, 0.05243302
  %v581 = vmul.f32 %v574, %v580
  %v582 = vadd.f32 %v581, 0.18741608
  %v583 = vmul.f32 %v574, %v582
  %v584 = vadd.f32 %v583, 1.1283791
  %v585 = vmul.f32 %v245, %v584
  %v586 = vmul.f32 %v574, 3.8918573e-05
  %v587 = vadd.f32 %v586, 0.001143296
  %v588 = vmul.f32 %v574, %v587
  %v589 = vadd.f32 %v588, 0.014752088
  %v590 = vmul.f32 %v574, %v589
  %v591 = vadd.f32 %v590, 0.112945676
  %v592 = vmul.f32 %v574, %v591
  %v593 = vadd.f32 %v592, 0.4994258
  %v594 = vmul.f32 %v574, %v593
  %v595 = vadd.f32 %v594, 1.0
  %v596 = vrcp.pop %v595
  %v597 = vmul.f32 %v595, %v596
  %v598 = vsub.f32 1.0, %v597
  %v599 = vmul.f32 %v596, %v598
  %v600 = vadd.f32 %v596, %v599
  %vm601 = vweird.f32 %v595
  %vm602 = vweird.f32 %v596
  %vm603 = vmor %vm601, %vm602
  %v604 = vsel %vm603, %v596, %v600
  %v605 = vand.u32 2147483647, %v595
  %vm606 = vcmp.eq.f32.partialorder %v605, 8.507059e+37
  %v607 = vand.u32 %v595, 2147483648
  %v608 = vor.u32 1.1754944e-38, %v607
  %v609 = vsel %vm606, %v608, %v604
  %v610 = vmul.f32 %v585, %v609
  %v611 = vmin.f32 %v610, 1.0
  %v612 = vmax.f32 %v611, -1.0
  %v613 = vmul.f32 %v246, %v246
  %v614 = vmin.f32 16.0, %v613
  %v615 = vmul.f32 %v614, 2.1237322e-06
  %v616 = vadd.f32 %v615, 0.00028619796
  %v617 = vmul.f32 %v614, %v616
  %v618 = vadd.f32 %v617, 0.0036580483
  %v619 = vmul.f32 %v614, %v618
  %v620 = vadd.f32 %v619, 0.05243302
  %v621 = vmul.f32 %v614, %v620
  %v622 = vadd.f32 %v621, 0.18741608
  %v623 = vmul.f32 %v614, %v622
  %v624 = vadd.f32 %v623, 1.1283791
  %v625 = vmul.f32 %v246, %v624
  %v626 = vmul.f32 %v614, 3.8918573e-05
  %v627 = vadd.f32 %v626, 0.001143296
  %v628 = vmul.f32 %v614, %v627
  %v629 = vadd.f32 %v628, 0.014752088
  %v630 = vmul.f32 %v614, %v629
  %v631 = vadd.f32 %v630, 0.112945676
  %v632 = vmul.f32 %v614, %v631
  %v633 = vadd.f32 %v632, 0.4994258
  %v634 = vmul.f32 %v614, %v633
  %v635 = vadd.f32 %v634, 1.0
  %v636 = vrcp.pop %v635
  %v637 = vmul.f32 %v635, %v636
  %v638 = vsub.f32 1.0, %v637
  %v639 = vmul.f32 %v636, %v638
  %v640 = vadd.f32 %v636, %v639
  %vm641 = vweird.f32 %v635
  %vm642 = vweird.f32 %v636
  %vm643 = vmor %vm641, %vm642
  %v644 = vsel %vm643, %v636, %v640
  %v645 = vand.u32 2147483647, %v635
  %vm646 = vcmp.eq.f32.partialorder %v645, 8.507059e+37
  %v647 = vand.u32 %v635, 2147483648
  %v648 = vor.u32 1.1754944e-38, %v647
  %v649 = vsel %vm646, %v648, %v644
  %v650 = vmul.f32 %v625, %v649
  %v651 = vmin.f32 %v650, 1.0
  %v652 = vmax.f32 %v651, -1.0
  %v653 = vmul.f32 %v247, %v247
  %v654 = vmin.f32 16.0, %v653
  %v655 = vmul.f32 %v654, 2.1237322e-06
  %v656 = vadd.f32 %v655, 0.00028619796
  %v657 = vmul.f32 %v654, %v656
  %v658 = vadd.f32 %v657, 0.0036580483
  %v659 = vmul.f32 %v654, %v658
  %v660 = vadd.f32 %v659, 0.05243302
  %v661 = vmul.f32 %v654, %v660
  %v662 = vadd.f32 %v661, 0.18741608
  %v663 = vmul.f32 %v654, %v662
  %v664 = vadd.f32 %v663, 1.1283791
  %v665 = vmul.f32 %v247, %v664
  %v666 = vmul.f32 %v654, 3.8918573e-05
  %v667 = vadd.f32 %v666, 0.001143296
  %v668 = vmul.f32 %v654, %v667
  %v669 = vadd.f32 %v668, 0.014752088
  %v670 = vmul.f32 %v654, %v669
  %v671 = vadd.f32 %v670, 0.112945676
  %v672 = vmul.f32 %v654, %v671
  %v673 = vadd.f32 %v672, 0.4994258
  %v674 = vmul.f32 %v654, %v673
  %v675 = vadd.f32 %v674, 1.0
  %v676 = vrcp.pop %v675
  %v677 = vmul.f32 %v675, %v676
  %v678 = vsub.f32 1.0, %v677
  %v679 = vmul.f32 %v676, %v678
  %v680 = vadd.f32 %v676, %v679
  %vm681 = vweird.f32 %v675
  %vm682 = vweird.f32 %v676
  %vm683 = vmor %vm681, %vm682
  %v684 = vsel %vm683, %v676, %v680
  %v685 = vand.u32 2147483647, %v675
  %vm686 = vcmp.eq.f32.partialorder %v685, 8.507059e+37
  %v687 = vand.u32 %v675, 2147483648
  %v688 = vor.u32 1.1754944e-38, %v687
  %v689 = vsel %vm686, %v688, %v684
  %v690 = vmul.f32 %v665, %v689
  %v691 = vmin.f32 %v690, 1.0
  %v692 = vmax.f32 %v691, -1.0
  %v693 = vmul.f32 %v248, %v248
  %v694 = vmin.f32 16.0, %v693
  %v695 = vmul.f32 %v694, 2.1237322e-06
  %v696 = vadd.f32 %v695, 0.00028619796
  %v697 = vmul.f32 %v694, %v696
  %v698 = vadd.f32 %v697, 0.0036580483
  %v699 = vmul.f32 %v694, %v698
  %v700 = vadd.f32 %v699, 0.05243302
  %v701 = vmul.f32 %v694, %v700
  %v702 = vadd.f32 %v701, 0.18741608
  %v703 = vmul.f32 %v694, %v702
  %v704 = vadd.f32 %v703, 1.1283791
  %v705 = vmul.f32 %v248, %v704
  %v706 = vmul.f32 %v694, 3.8918573e-05
  %v707 = vadd.f32 %v706, 0.001143296
  %v708 = vmul.f32 %v694, %v707
  %v709 = vadd.f32 %v708, 0.014752088
  %v710 = vmul.f32 %v694, %v709
  %v711 = vadd.f32 %v710, 0.112945676
  %v712 = vmul.f32 %v694, %v711
  %v713 = vadd.f32 %v712, 0.4994258
  %v714 = vmul.f32 %v694, %v713
  %v715 = vadd.f32 %v714, 1.0
  %v716 = vrcp.pop %v715
  %v717 = vmul.f32 %v715, %v716
  %v718 = vsub.f32 1.0, %v717
  %v719 = vmul.f32 %v716, %v718
  %v720 = vadd.f32 %v716, %v719
  %vm721 = vweird.f32 %v715
  %vm722 = vweird.f32 %v716
  %vm723 = vmor %vm721, %vm722
  %v724 = vsel %vm723, %v716, %v720
  %v725 = vand.u32 2147483647, %v715
  %vm726 = vcmp.eq.f32.partialorder %v725, 8.507059e+37
  %v727 = vand.u32 %v715, 2147483648
  %v728 = vor.u32 1.1754944e-38, %v727
  %v729 = vsel %vm726, %v728, %v724
  %v730 = vmul.f32 %v705, %v729
  %v731 = vmin.f32 %v730, 1.0
  %v732 = vmax.f32 %v731, -1.0
  %v733 = vmul.f32 %v249, %v249
  %v734 = vmin.f32 16.0, %v733
  %v735 = vmul.f32 %v734, 2.1237322e-06
  %v736 = vadd.f32 %v735, 0.00028619796
  %v737 = vmul.f32 %v734, %v736
  %v738 = vadd.f32 %v737, 0.0036580483
  %v739 = vmul.f32 %v734, %v738
  %v740 = vadd.f32 %v739, 0.05243302
  %v741 = vmul.f32 %v734, %v740
  %v742 = vadd.f32 %v741, 0.18741608
  %v743 = vmul.f32 %v734, %v742
  %v744 = vadd.f32 %v743, 1.1283791
  %v745 = vmul.f32 %v249, %v744
  %v746 = vmul.f32 %v734, 3.8918573e-05
  %v747 = vadd.f32 %v746, 0.001143296
  %v748 = vmul.f32 %v734, %v747
  %v749 = vadd.f32 %v748, 0.014752088
  %v750 = vmul.f32 %v734, %v749
  %v751 = vadd.f32 %v750, 0.112945676
  %v752 = vmul.f32 %v734, %v751
  %v753 = vadd.f32 %v752, 0.4994258
  %v754 = vmul.f32 %v734, %v753
  %v755 = vadd.f32 %v754, 1.0
  %v756 = vrcp.pop %v755
  %v757 = vmul.f32 %v755, %v756
  %v758 = vsub.f32 1.0, %v757
  %v759 = vmul.f32 %v756, %v758
  %v760 = vadd.f32 %v756, %v759
  %vm761 = vweird.f32 %v755
  %vm762 = vweird.f32 %v756
  %vm763 = vmor %vm761, %vm762
  %v764 = vsel %vm763, %v756, %v760
  %v765 = vand.u32 2147483647, %v755
  %vm766 = vcmp.eq.f32.partialorder %v765, 8.507059e+37
  %v767 = vand.u32 %v755, 2147483648
  %v768 = vor.u32 1.1754944e-38, %v767
  %v769 = vsel %vm766, %v768, %v764
  %v770 = vmul.f32 %v745, %v769
  %v771 = vmin.f32 %v770, 1.0
  %v772 = vmax.f32 %v771, -1.0
  %v773 = vmul.f32 %v250, %v250
  %v774 = vmin.f32 16.0, %v773
  %v775 = vmul.f32 %v774, 2.1237322e-06
  %v776 = vadd.f32 %v775, 0.00028619796
  %v777 = vmul.f32 %v774, %v776
  %v778 = vadd.f32 %v777, 0.0036580483
  %v779 = vmul.f32 %v774, %v778
  %v780 = vadd.f32 %v779, 0.05243302
  %v781 = vmul.f32 %v774, %v780
  %v782 = vadd.f32 %v781, 0.18741608
  %v783 = vmul.f32 %v774, %v782
  %v784 = vadd.f32 %v783, 1.1283791
  %v785 = vmul.f32 %v250, %v784
  %v786 = vmul.f32 %v774, 3.8918573e-05
  %v787 = vadd.f32 %v786, 0.001143296
  %v788 = vmul.f32 %v774, %v787
  %v789 = vadd.f32 %v788, 0.014752088
  %v790 = vmul.f32 %v774, %v789
  %v791 = vadd.f32 %v790, 0.112945676
  %v792 = vmul.f32 %v774, %v791
  %v793 = vadd.f32 %v792, 0.4994258
  %v794 = vmul.f32 %v774, %v793
  %v795 = vadd.f32 %v794, 1.0
  %v796 = vrcp.pop %v795
  %v797 = vmul.f32 %v795, %v796
  %v798 = vsub.f32 1.0, %v797
  %v799 = vmul.f32 %v796, %v798
  %v800 = vadd.f32 %v796, %v799
  %vm801 = vweird.f32 %v795
  %vm802 = vweird.f32 %v796
  %vm803 = vmor %vm801, %vm802
  %v804 = vsel %vm803, %v796, %v800
  %v805 = vand.u32 2147483647, %v795
  %vm806 = vcmp.eq.f32.partialorder %v805, 8.507059e+37
  %v807 = vand.u32 %v795, 2147483648
  %v808 = vor.u32 1.1754944e-38, %v807
  %v809 = vsel %vm806, %v808, %v804
  %v810 = vmul.f32 %v785, %v809
  %v811 = vmin.f32 %v810, 1.0
  %v812 = vmax.f32 %v811, -1.0
  %v813 = vmul.f32 %v251, %v251
  %v814 = vmin.f32 16.0, %v813
  %v815 = vmul.f32 %v814, 2.1237322e-06
  %v816 = vadd.f32 %v815, 0.00028619796
  %v817 = vmul.f32 %v814, %v816
  %v818 = vadd.f32 %v817, 0.0036580483
  %v819 = vmul.f32 %v814, %v818
  %v820 = vadd.f32 %v819, 0.05243302
  %v821 = vmul.f32 %v814, %v820
  %v822 = vadd.f32 %v821, 0.18741608
  %v823 = vmul.f32 %v814, %v822
  %v824 = vadd.f32 %v823, 1.1283791
  %v825 = vmul.f32 %v251, %v824
  %v826 = vmul.f32 %v814, 3.8918573e-05
  %v827 = vadd.f32 %v826, 0.001143296
  %v828 = vmul.f32 %v814, %v827
  %v829 = vadd.f32 %v828, 0.014752088
  %v830 = vmul.f32 %v814, %v829
  %v831 = vadd.f32 %v830, 0.112945676
  %v832 = vmul.f32 %v814, %v831
  %v833 = vadd.f32 %v832, 0.4994258
  %v834 = vmul.f32 %v814, %v833
  %v835 = vadd.f32 %v834, 1.0
  %v836 = vrcp.pop %v835
  %v837 = vmul.f32 %v835, %v836
  %v838 = vsub.f32 1.0, %v837
  %v839 = vmul.f32 %v836, %v838
  %v840 = vadd.f32 %v836, %v839
  %vm841 = vweird.f32 %v835
  %vm842 = vweird.f32 %v836
  %vm843 = vmor %vm841, %vm842
  %v844 = vsel %vm843, %v836, %v840
  %v845 = vand.u32 2147483647, %v835
  %vm846 = vcmp.eq.f32.partialorder %v845, 8.507059e+37
  %v847 = vand.u32 %v835, 2147483648
  %v848 = vor.u32 1.1754944e-38, %v847
  %v849 = vsel %vm846, %v848, %v844
  %v850 = vmul.f32 %v825, %v849
  %v851 = vmin.f32 %v850, 1.0
  %v852 = vmax.f32 %v851, -1.0
  %v853 = vmul.f32 %v252, %v252
  %v854 = vmin.f32 16.0, %v853
  %v855 = vmul.f32 %v854, 2.1237322e-06
  %v856 = vadd.f32 %v855, 0.00028619796
  %v857 = vmul.f32 %v854, %v856
  %v858 = vadd.f32 %v857, 0.0036580483
  %v859 = vmul.f32 %v854, %v858
  %v860 = vadd.f32 %v859, 0.05243302
  %v861 = vmul.f32 %v854, %v860
  %v862 = vadd.f32 %v861, 0.18741608
  %v863 = vmul.f32 %v854, %v862
  %v864 = vadd.f32 %v863, 1.1283791
  %v865 = vmul.f32 %v252, %v864
  %v866 = vmul.f32 %v854, 3.8918573e-05
  %v867 = vadd.f32 %v866, 0.001143296
  %v868 = vmul.f32 %v854, %v867
  %v869 = vadd.f32 %v868, 0.014752088
  %v870 = vmul.f32 %v854, %v869
  %v871 = vadd.f32 %v870, 0.112945676
  %v872 = vmul.f32 %v854, %v871
  %v873 = vadd.f32 %v872, 0.4994258
  %v874 = vmul.f32 %v854, %v873
  %v875 = vadd.f32 %v874, 1.0
  %v876 = vrcp.pop %v875
  %v877 = vmul.f32 %v875, %v876
  %v878 = vsub.f32 1.0, %v877
  %v879 = vmul.f32 %v876, %v878
  %v880 = vadd.f32 %v876, %v879
  %vm881 = vweird.f32 %v875
  %vm882 = vweird.f32 %v876
  %vm883 = vmor %vm881, %vm882
  %v884 = vsel %vm883, %v876, %v880
  %v885 = vand.u32 2147483647, %v875
  %vm886 = vcmp.eq.f32.partialorder %v885, 8.507059e+37
  %v887 = vand.u32 %v875, 2147483648
  %v888 = vor.u32 1.1754944e-38, %v887
  %v889 = vsel %vm886, %v888, %v884
  %v890 = vmul.f32 %v865, %v889
  %v891 = vmin.f32 %v890, 1.0
  %v892 = vmax.f32 %v891, -1.0
  %v893 = vadd.f32 %v292, 1.0
  %v894 = vadd.f32 %v332, 1.0
  %v895 = vadd.f32 %v372, 1.0
  %v896 = vadd.f32 %v412, 1.0
  %v897 = vadd.f32 %v452, 1.0
  %v898 = vadd.f32 %v492, 1.0
  %v899 = vadd.f32 %v532, 1.0
  %v900 = vadd.f32 %v572, 1.0
  %v901 = vadd.f32 %v612, 1.0
  %v902 = vadd.f32 %v652, 1.0
  %v903 = vadd.f32 %v692, 1.0
  %v904 = vadd.f32 %v732, 1.0
  %v905 = vadd.f32 %v772, 1.0
  %v906 = vadd.f32 %v812, 1.0
  %v907 = vadd.f32 %v852, 1.0
  %v908 = vadd.f32 %v892, 1.0
  %v909 = vmul.f32 %v221, %v893
  %v910 = vmul.f32 %v222, %v894
  %v911 = vmul.f32 %v223, %v895
  %v912 = vmul.f32 %v224, %v896
  %v913 = vmul.f32 %v225, %v897
  %v914 = vmul.f32 %v226, %v898
  %v915 = vmul.f32 %v227, %v899
  %v916 = vmul.f32 %v228, %v900
  %v917 = vmul.f32 %v229, %v901
  %v918 = vmul.f32 %v230, %v902
  %v919 = vmul.f32 %v231, %v903
  %v920 = vmul.f32 %v232, %v904
  %v921 = vmul.f32 %v233, %v905
  %v922 = vmul.f32 %v234, %v906
  %v923 = vmul.f32 %v235, %v907
  %v924 = vmul.f32 %v236, %v908
  %v925 = vld [vmem:[%s5] sm:$0xff]
  %v926 = vld [vmem:[%s5 + $0x8] sm:$0xff]
  %v927 = vld [vmem:[%s5 + $0x10] sm:$0xff]
  %v928 = vld [vmem:[%s5 + $0x18] sm:$0xff]
  %v929 = vld [vmem:[%s5 + $0x20] sm:$0xff]
  %v930 = vld [vmem:[%s5 + $0x28] sm:$0xff]
  %v931 = vld [vmem:[%s5 + $0x30] sm:$0xff]
  %v932 = vld [vmem:[%s5 + $0x38] sm:$0xff]
  %v933 = vld [vmem:[%s5 + $0x40] sm:$0xff]
  %v934 = vld [vmem:[%s5 + $0x48] sm:$0xff]
  %v935 = vld [vmem:[%s5 + $0x50] sm:$0xff]
  %v936 = vld [vmem:[%s5 + $0x58] sm:$0xff]
  %v937 = vld [vmem:[%s5 + $0x60] sm:$0xff]
  %v938 = vld [vmem:[%s5 + $0x68] sm:$0xff]
  %v939 = vld [vmem:[%s5 + $0x70] sm:$0xff]
  %v940 = vld [vmem:[%s5 + $0x78] sm:$0xff]
  %v941 = vpack.c.bf16 %v910, %v909
  %v942 = vpack.c.bf16 %v912, %v911
  %v943 = vpack.c.bf16 %v914, %v913
  %v944 = vpack.c.bf16 %v916, %v915
  %v945 = vpack.c.bf16 %v918, %v917
  %v946 = vpack.c.bf16 %v920, %v919
  %v947 = vpack.c.bf16 %v922, %v921
  %v948 = vpack.c.bf16 %v924, %v923
  %v949 = vld [vmem:[%s3] sm:$0xf]
  %v950 = vld [vmem:[%s3 + $0x4] sm:$0xf]
  %v951 = vld [vmem:[%s3 + $0x8] sm:$0xf]
  %v952 = vld [vmem:[%s3 + $0xc] sm:$0xf]
  %v953 = vld [vmem:[%s3 + $0x10] sm:$0xf]
  %v954 = vld [vmem:[%s3 + $0x14] sm:$0xf]
  %v955 = vld [vmem:[%s3 + $0x18] sm:$0xf]
  %v956 = vld [vmem:[%s3 + $0x1c] sm:$0xf]
  %v957 = vld [vmem:[%s3 + $0x20] sm:$0xf]
  %v958 = vld [vmem:[%s3 + $0x24] sm:$0xf]
  %v959 = vld [vmem:[%s3 + $0x28] sm:$0xf]
  %v960 = vld [vmem:[%s3 + $0x2c] sm:$0xf]
  %v961 = vld [vmem:[%s3 + $0x30] sm:$0xf]
  %v962 = vld [vmem:[%s3 + $0x34] sm:$0xf]
  %v963 = vld [vmem:[%s3 + $0x38] sm:$0xf]
  %v964 = vld [vmem:[%s3 + $0x3c] sm:$0xf]
  %v981 = vunpack.c.l.b16 %v949
  %v982 = vunpack.c.l.b16 %v950
  %v983 = vunpack.c.l.b16 %v951
  %v984 = vunpack.c.l.b16 %v952
  %v985 = vunpack.c.l.b16 %v953
  %v986 = vunpack.c.l.b16 %v954
  %v987 = vunpack.c.l.b16 %v955
  %v988 = vunpack.c.l.b16 %v956
  %v989 = vunpack.c.l.b16 %v957
  %v990 = vunpack.c.l.b16 %v958
  %v991 = vunpack.c.l.b16 %v959
  %v992 = vunpack.c.l.b16 %v960
  %v993 = vunpack.c.l.b16 %v961
  %v994 = vunpack.c.l.b16 %v962
  %v995 = vunpack.c.l.b16 %v963
  %v996 = vunpack.c.l.b16 %v964
  %v997 = vpack.c.b16 %v982, %v981
  %v998 = vpack.c.b16 %v984, %v983
  %v999 = vpack.c.b16 %v986, %v985
  %v1000 = vpack.c.b16 %v988, %v987
  %v1001 = vpack.c.b16 %v990, %v989
  %v1002 = vpack.c.b16 %v992, %v991
  %v1003 = vpack.c.b16 %v994, %v993
  %v1004 = vpack.c.b16 %v996, %v995
  %1013 = vmatpush.bf16.msra.mxu0 %v1004
  %1014 = vmatpush.bf16.msra.mxu0 %v1003
  %1015 = vmatpush.bf16.msra.mxu0 %v1002
  %1016 = vmatpush.bf16.msra.mxu0 %v1001
  %1017 = vmatpush.bf16.msra.mxu0 %v1000
  %1018 = vmatpush.bf16.msra.mxu0 %v999
  %1019 = vmatpush.bf16.msra.mxu0 %v998
  %1020 = vmatpush.bf16.msra.mxu0 %v997
  %1021 = vmatmul.bf16.gmra.mxu0 %v941
  %v1022 = vpop.f32.mrf.mxu0
  %v1023 = vadd.f32 0.0, %v1022
  %v1024 = vpop.f32.mrf.mxu0
  %v1025 = vadd.f32 0.0, %v1024
  %1026 = vmatmul.bf16.gmra.mxu0 %v942
  %v1027 = vpop.f32.mrf.mxu0
  %v1028 = vadd.f32 0.0, %v1027
  %v1029 = vpop.f32.mrf.mxu0
  %v1030 = vadd.f32 0.0, %v1029
  %1031 = vmatmul.bf16.gmra.mxu0 %v943
  %v1032 = vpop.f32.mrf.mxu0
  %v1033 = vadd.f32 0.0, %v1032
  %v1034 = vpop.f32.mrf.mxu0
  %v1035 = vadd.f32 0.0, %v1034
  %1036 = vmatmul.bf16.gmra.mxu0 %v944
  %v1037 = vpop.f32.mrf.mxu0
  %v1038 = vadd.f32 0.0, %v1037
  %v1039 = vpop.f32.mrf.mxu0
  %v1040 = vadd.f32 0.0, %v1039
  %1041 = vmatmul.bf16.gmra.mxu0 %v945
  %v1042 = vpop.f32.mrf.mxu0
  %v1043 = vadd.f32 0.0, %v1042
  %v1044 = vpop.f32.mrf.mxu0
  %v1045 = vadd.f32 0.0, %v1044
  %1046 = vmatmul.bf16.gmra.mxu0 %v946
  %v1047 = vpop.f32.mrf.mxu0
  %v1048 = vadd.f32 0.0, %v1047
  %v1049 = vpop.f32.mrf.mxu0
  %v1050 = vadd.f32 0.0, %v1049
  %1051 = vmatmul.bf16.gmra.mxu0 %v947
  %v1052 = vpop.f32.mrf.mxu0
  %v1053 = vadd.f32 0.0, %v1052
  %v1054 = vpop.f32.mrf.mxu0
  %v1055 = vadd.f32 0.0, %v1054
  %1056 = vmatmul.bf16.gmra.mxu0 %v948
  %v1057 = vpop.f32.mrf.mxu0
  %v1058 = vadd.f32 0.0, %v1057
  %v1059 = vpop.f32.mrf.mxu0
  %v1060 = vadd.f32 0.0, %v1059
  %1061 = vdwg.mxu0
  %v1062 = vadd.f32 %v925, %v1023
  %v1063 = vadd.f32 %v926, %v1025
  %v1064 = vadd.f32 %v927, %v1028
  %v1065 = vadd.f32 %v928, %v1030
  %v1066 = vadd.f32 %v929, %v1033
  %v1067 = vadd.f32 %v930, %v1035
  %v1068 = vadd.f32 %v931, %v1038
  %v1069 = vadd.f32 %v932, %v1040
  %v1070 = vadd.f32 %v933, %v1043
  %v1071 = vadd.f32 %v934, %v1045
  %v1072 = vadd.f32 %v935, %v1048
  %v1073 = vadd.f32 %v936, %v1050
  %v1074 = vadd.f32 %v937, %v1053
  %v1075 = vadd.f32 %v938, %v1055
  %v1076 = vadd.f32 %v939, %v1058
  %v1077 = vadd.f32 %v940, %v1060
  %1078 = vst [vmem:[%s5] sm:$0xff] %v1062
  %1079 = vst [vmem:[%s5 + $0x8] sm:$0xff] %v1063
  %1080 = vst [vmem:[%s5 + $0x10] sm:$0xff] %v1064
  %1081 = vst [vmem:[%s5 + $0x18] sm:$0xff] %v1065
  %1082 = vst [vmem:[%s5 + $0x20] sm:$0xff] %v1066
  %1083 = vst [vmem:[%s5 + $0x28] sm:$0xff] %v1067
  %1084 = vst [vmem:[%s5 + $0x30] sm:$0xff] %v1068
  %1085 = vst [vmem:[%s5 + $0x38] sm:$0xff] %v1069
  %1086 = vst [vmem:[%s5 + $0x40] sm:$0xff] %v1070
  %1087 = vst [vmem:[%s5 + $0x48] sm:$0xff] %v1071
  %1088 = vst [vmem:[%s5 + $0x50] sm:$0xff] %v1072
  %1089 = vst [vmem:[%s5 + $0x58] sm:$0xff] %v1073
  %1090 = vst [vmem:[%s5 + $0x60] sm:$0xff] %v1074
  %1091 = vst [vmem:[%s5 + $0x68] sm:$0xff] %v1075
  %1092 = vst [vmem:[%s5 + $0x70] sm:$0xff] %v1076
  %1093 = vst [vmem:[%s5 + $0x78] sm:$0xff] %v1077
  // Predicated region
  $region26: #{feed_forward_network.1} parent=0 // pred_check
    %p1094 = pneg %p20
  $region27: #{feed_forward_network.1} parent=0 // pred_check_branch
    %1096 = sbr.rel (%p1094) target = $region29
  $region28: #{feed_forward_network.1} parent=0 // pred_region
    %v1097 = vld [vmem:[%s5] sm:$0xff]
    %v1098 = vld [vmem:[%s5 + $0x8] sm:$0xff]
    %v1099 = vld [vmem:[%s5 + $0x10] sm:$0xff]
    %v1100 = vld [vmem:[%s5 + $0x18] sm:$0xff]
    %v1101 = vld [vmem:[%s5 + $0x20] sm:$0xff]
    %v1102 = vld [vmem:[%s5 + $0x28] sm:$0xff]
    %v1103 = vld [vmem:[%s5 + $0x30] sm:$0xff]
    %v1104 = vld [vmem:[%s5 + $0x38] sm:$0xff]
    %v1105 = vld [vmem:[%s5 + $0x40] sm:$0xff]
    %v1106 = vld [vmem:[%s5 + $0x48] sm:$0xff]
    %v1107 = vld [vmem:[%s5 + $0x50] sm:$0xff]
    %v1108 = vld [vmem:[%s5 + $0x58] sm:$0xff]
    %v1109 = vld [vmem:[%s5 + $0x60] sm:$0xff]
    %v1110 = vld [vmem:[%s5 + $0x68] sm:$0xff]
    %v1111 = vld [vmem:[%s5 + $0x70] sm:$0xff]
    %v1112 = vld [vmem:[%s5 + $0x78] sm:$0xff]
    %v1113 = vld [vmem:[%s4] sm:$0x1]
    %v1115 = vperm.slane %v1113, 0
    %v1117 = vadd.f32 %v1097, %v1115
    %v1118 = vadd.f32 %v1098, %v1115
    %v1119 = vadd.f32 %v1099, %v1115
    %v1120 = vadd.f32 %v1100, %v1115
    %v1121 = vadd.f32 %v1101, %v1115
    %v1122 = vadd.f32 %v1102, %v1115
    %v1123 = vadd.f32 %v1103, %v1115
    %v1124 = vadd.f32 %v1104, %v1115
    %v1125 = vadd.f32 %v1105, %v1115
    %v1126 = vadd.f32 %v1106, %v1115
    %v1127 = vadd.f32 %v1107, %v1115
    %v1128 = vadd.f32 %v1108, %v1115
    %v1129 = vadd.f32 %v1109, %v1115
    %v1130 = vadd.f32 %v1110, %v1115
    %v1131 = vadd.f32 %v1111, %v1115
    %v1132 = vadd.f32 %v1112, %v1115
    %1133 = vst [vmem:[%s5] sm:$0xff] %v1117
    %1134 = vst [vmem:[%s5 + $0x8] sm:$0xff] %v1118
    %1135 = vst [vmem:[%s5 + $0x10] sm:$0xff] %v1119
    %1136 = vst [vmem:[%s5 + $0x18] sm:$0xff] %v1120
    %1137 = vst [vmem:[%s5 + $0x20] sm:$0xff] %v1121
    %1138 = vst [vmem:[%s5 + $0x28] sm:$0xff] %v1122
    %1139 = vst [vmem:[%s5 + $0x30] sm:$0xff] %v1123
    %1140 = vst [vmem:[%s5 + $0x38] sm:$0xff] %v1124
    %1141 = vst [vmem:[%s5 + $0x40] sm:$0xff] %v1125
    %1142 = vst [vmem:[%s5 + $0x48] sm:$0xff] %v1126
    %1143 = vst [vmem:[%s5 + $0x50] sm:$0xff] %v1127
    %1144 = vst [vmem:[%s5 + $0x58] sm:$0xff] %v1128
    %1145 = vst [vmem:[%s5 + $0x60] sm:$0xff] %v1129
    %1146 = vst [vmem:[%s5 + $0x68] sm:$0xff] %v1130
    %1147 = vst [vmem:[%s5 + $0x70] sm:$0xff] %v1131
    %1148 = vst [vmem:[%s5 + $0x78] sm:$0xff] %v1132
  $region29: #{feed_forward_network.1} parent=0 // pred_fallthru
    _
  // Predicated region
  $region30: #{feed_forward_network.1} parent=0 // pred_check
    _
  $region31: #{feed_forward_network.1} parent=0 // pred_check_branch
    %1150 = sbr.rel (0) target = $region33
  $region32: #{feed_forward_network.1} parent=0 // pred_region
    _
  $region33: #{feed_forward_network.1} parent=0 // pred_fallthru
    _
  // Predicated region
  $region34: #{feed_forward_network.1} parent=0 // pred_check
    _
  $region35: #{feed_forward_network.1} parent=0 // pred_check_branch
    %1152 = sbr.rel (0) target = $region37
  $region36: #{feed_forward_network.1} parent=0 // pred_region
    _
  $region37: #{feed_forward_network.1} parent=0 // pred_fallthru
    _

</llo_original>
